<compile_context>
chip_gen: v5e
topology: v5e:2x2
jax: 0.10.0
libtpu: 0.0.40
codegen_flags: <defaults>
</compile_context>

<pallas_src>
import functools

import jax
import jax.numpy as jnp
from jax.experimental import pallas as pl
from jax.experimental.pallas import tpu as pltpu

_LANE = 128


def _vmem_limit_bytes():
    """~80% of this generation's per-core VMEM (v7x: ~51 MiB, v5e/v6e: ~102 MiB)."""
    try:
        cap = pltpu.get_tpu_info().vmem_capacity_bytes
    except Exception:
        cap = 64 << 20  # conservative (v7x per-TensorCore)
    return int(cap * 0.8)


def _pick_hw_tile(HW, C, itemsize=4, budget_bytes=2 << 20):
    """Largest 128-multiple HW tile keeping a (C, tHW) f32 plane under ~2 MiB."""
    hw128 = pl.cdiv(HW, _LANE) * _LANE
    max_lanes = max(_LANE, (budget_bytes // max(C * itemsize, 1)) // _LANE * _LANE)
    tHW = int(min(hw128, max_lanes))
    HW_pad = int(pl.cdiv(HW, tHW) * tHW)
    return tHW, HW_pad


def _stats_kernel(x_ref, mean_ref, rstd_ref, sum_ref, ssq_ref, *, inv_count, eps):
    """Pass 1: GroupNorm(num_groups=1) stats per sample, single traversal (sum & sumsq).

    x: (1, C, tHW) tile; mean/rstd out: (1, 1, 1); scratch: (1, 1) f32 accumulators.
    Grid = (n, HW tiles); HW axis is the reduction ("arbitrary") axis.
    """
    k = pl.program_id(1)

    @pl.when(k == 0)
    def _():
        sum_ref[...] = jnp.zeros_like(sum_ref)
        ssq_ref[...] = jnp.zeros_like(ssq_ref)

    x = x_ref[0].astype(jnp.float32)                     # (C, tHW)
    sum_ref[...] += jnp.sum(x, keepdims=True)            # f32 accumulation
    ssq_ref[...] += jnp.sum(x * x, keepdims=True)

    @pl.when(k == pl.num_programs(1) - 1)
    def _():
        mean = sum_ref[...] * inv_count
        var = ssq_ref[...] * inv_count - mean * mean     # single-pass (biased) variance
        var = jnp.maximum(var, 0.0)                      # guard f32 cancellation
        mean_ref[0] = mean
        rstd_ref[0] = jax.lax.rsqrt(var + eps)


def _film_kernel(coords_ref, w0_ref, b0_ref, w1_ref, b1_ref, gamma_ref, beta_ref,
                 mean_ref, rstd_ref, x_ref, out_ref, *, compute_dtype):
    """Pass 2: fused coordinate MLP + GroupNorm-affine-folded FiLM + SiLU for one HW tile.

    coords: (4, tHW); w0: (2C, 4); w1: (2C, 2C); biases/affine: column vectors;
    mean/rstd: (1, 1, 1); x/out: (1, C, tHW).
    """
    C = out_ref.shape[1]

    # Coordinate MLP, recomputed per (sample, HW tile): cheap MXU work vs. the 2*C*HW
    # HBM round trip a materialized scale/shift would cost.  K=4 underfills the MXU but
    # the contraction is tiny.
    h0 = jnp.dot(w0_ref[...], coords_ref[...],
                 preferred_element_type=jnp.float32) + b0_ref[...]       # (2C, tHW)
    h0 = jnp.sin(h0)
    h0 = h0 * jax.nn.sigmoid(h0)                                         # SiLU
    ff = jnp.dot(w1_ref[...], h0,
                 preferred_element_type=jnp.float32) + b1_ref[...]       # (2C, tHW)

    # chunk(ff, 2, dim=channel): sublane-axis split (alignment-free when C % 8 == 0;
    # still correct otherwise, just a relayout).
    scale = ff[:C, :]
    shift = ff[C:, :]

    # Fold GroupNorm affine into the FiLM constants:
    #   (gn*gamma + beta)*(1+scale) + shift = gn*scale' + shift'
    one_plus = 1.0 + scale
    scale_p = gamma_ref[...] * one_plus
    shift_p = beta_ref[...] * one_plus + shift

    # Normalize (f32 stats), then FiLM + SiLU in compute_dtype (bf16 when x is bf16).
    x = x_ref[0].astype(jnp.float32)                                     # (C, tHW)
    xn = ((x - mean_ref[0]) * rstd_ref[0]).astype(compute_dtype)
    y = xn * scale_p.astype(compute_dtype) + shift_p.astype(compute_dtype)
    out_ref[0] = (y * jax.nn.sigmoid(y)).astype(out_ref.dtype)


def coordinates_emb(x_nchw, dt, vt, params, N, T):
    n, C, h, w = x_nchw.shape
    hidden = params["w1"].shape[0]
    assert hidden == 2 * C, "hidden_size must equal 2 * channels(x)"
    HW = h * w
    f32 = jnp.float32

    # ----- coordinate construction (batch-invariant, channel-major (4, HW)) -----
    coords_W = jnp.broadcast_to(jnp.linspace(-1.0, 1.0, h, dtype=f32)[:, None], (h, w))
    coords_H = jnp.broadcast_to(jnp.linspace(-1.0, 1.0, w, dtype=f32)[None, :], (h, w))
    t_coord = jnp.linspace(-1.0, 1.0, T, dtype=f32)[dt]      # diffusion timestep
    n_coord = jnp.linspace(-1.0, 1.0, N, dtype=f32)[vt]      # video timestep
    coords = jnp.stack([jnp.broadcast_to(t_coord, (h, w)),
                        jnp.broadcast_to(n_coord, (h, w)),
                        coords_H, coords_W], axis=0).reshape(4, HW)

    # PyTorch-native (out, in) weights; biases/affine reshaped to column vectors.
    w0 = params["w0"].astype(f32)                          # (hidden, 4)
    b0 = params["b0"].reshape(hidden, 1).astype(f32)
    w1 = params["w1"].astype(f32)                          # (hidden, hidden)
    b1 = params["b1"].reshape(hidden, 1).astype(f32)
    gamma = params["gamma"].reshape(C, 1).astype(f32)
    beta = params["beta"].reshape(C, 1).astype(f32)

    # ----- lane-dense HW tiling (multiple of 128), zero padding if needed -----
    tHW, HW_pad = _pick_hw_tile(HW, C, itemsize=4)
    KT = HW_pad // tHW
    x3 = x_nchw.reshape(n, C, HW)
    if HW_pad != HW:
        x3 = jnp.pad(x3, ((0, 0), (0, 0), (0, HW_pad - HW)))      # zeros: no effect on sums
        coords = jnp.pad(coords, ((0, 0), (0, HW_pad - HW)))

    vmem_limit = _vmem_limit_bytes()
    eps = 1e-5
    inv_count = 1.0 / float(C * HW)   # true element count (padding contributes 0 to sums)

    # ----- pass 1: per-sample GroupNorm(1) stats (sum & sumsq in one traversal) -----
    mean, rstd = pl.pallas_call(
        functools.partial(_stats_kernel, inv_count=inv_count, eps=eps),
        out_shape=(jax.ShapeDtypeStruct((n, 1, 1), f32),
                   jax.ShapeDtypeStruct((n, 1, 1), f32)),
        grid_spec=pltpu.PrefetchScalarGridSpec(
            num_scalar_prefetch=0,
            grid=(n, KT),
            in_specs=[pl.BlockSpec((1, C, tHW), lambda i, k: (i, 0, k))],
            out_specs=(pl.BlockSpec((1, 1, 1), lambda i, k: (i, 0, 0)),
                       pl.BlockSpec((1, 1, 1), lambda i, k: (i, 0, 0))),
            scratch_shapes=[pltpu.VMEM((1, 1), f32),
                            pltpu.VMEM((1, 1), f32)],
        ),
        compiler_params=pltpu.CompilerParams(
            dimension_semantics=("parallel", "arbitrary"),
            vmem_limit_bytes=vmem_limit),
    )(x3)

    # ----- pass 2: fused coord MLP + folded-affine FiLM + SiLU -----
    compute_dtype = jnp.bfloat16 if x3.dtype == jnp.bfloat16 else jnp.float32
    out = pl.pallas_call(
        functools.partial(_film_kernel, compute_dtype=compute_dtype),
        out_shape=jax.ShapeDtypeStruct((n, C, HW_pad), x3.dtype),
        grid_spec=pltpu.PrefetchScalarGridSpec(
            num_scalar_prefetch=0,
            grid=(n, KT),
            in_specs=[
                pl.BlockSpec((4, tHW), lambda i, k: (0, k)),           # coords tile
                pl.BlockSpec((hidden, 4), lambda i, k: (0, 0)),        # w0 (resident)
                pl.BlockSpec((hidden, 1), lambda i, k: (0, 0)),        # b0
                pl.BlockSpec((hidden, hidden), lambda i, k: (0, 0)),   # w1
                pl.BlockSpec((hidden, 1), lambda i, k: (0, 0)),        # b1
                pl.BlockSpec((C, 1), lambda i, k: (0, 0)),             # gamma
                pl.BlockSpec((C, 1), lambda i, k: (0, 0)),             # beta
                pl.BlockSpec((1, 1, 1), lambda i, k: (i, 0, 0)),       # mean
                pl.BlockSpec((1, 1, 1), lambda i, k: (i, 0, 0)),       # rstd
                pl.BlockSpec((1, C, tHW), lambda i, k: (i, 0, k)),     # x tile
            ],
            out_specs=pl.BlockSpec((1, C, tHW), lambda i, k: (i, 0, k)),
        ),
        compiler_params=pltpu.CompilerParams(
            dimension_semantics=("parallel", "parallel"),
            vmem_limit_bytes=vmem_limit),
    )(coords, w0, b0, w1, b1, gamma, beta, mean, rstd, x3)

    if HW_pad != HW:
        out = out[:, :, :HW]
    return out.reshape(n, C, h, w)


if __name__ == "__main__":
    key = jax.random.PRNGKey(0)
    n, C, h, w = 2, 16, 16, 16          # x channels C; spatial 16x16
    hidden = 2 * C                      # hidden_size
    N_steps, T_steps = 8, 10            # video timesteps N, diffusion timesteps T

    k1, k2, k3, k4, k5 = jax.random.split(key, 5)
    x = jax.random.normal(k1, (n, C, h, w), dtype=jnp.float32)

    params = dict(
        w0=jax.random.normal(k2, (hidden, 4), jnp.float32) * 0.5,                    # linear_0 weight (out, in)
        b0=jax.random.normal(k3, (hidden,), jnp.float32) * 0.1,                      # linear_0 bias
        w1=jax.random.normal(k4, (hidden, hidden), jnp.float32) * (hidden ** -0.5),  # linear_1 weight (out, in)
        b1=jax.random.normal(k5, (hidden,), jnp.float32) * 0.1,                      # linear_1 bias
        gamma=jnp.ones((C,), jnp.float32),                                           # GroupNorm affine
        beta=jnp.zeros((C,), jnp.float32),
    )

    out = coordinates_emb(x, dt=3, vt=2, params=params, N=N_steps, T=T_steps)
    jax.block_until_ready(out)
    assert out.shape == (n, C, h, w)
    print("KERNEL_OK")
</pallas_src>

<mosaic_0001>
module attributes {stable_mosaic.version = 11 : i64} {
  func.func @_stats_kernel(%arg0: i32, %arg1: i32, %arg2: memref<1x16x256xf32, #tpu.memory_space<vmem>>, %arg3: memref<1x1x1xf32, #tpu.memory_space<vmem>>, %arg4: memref<1x1x1xf32, #tpu.memory_space<vmem>>, %arg5: memref<1x1xf32, #tpu.memory_space<vmem>>, %arg6: memref<1x1xf32, #tpu.memory_space<vmem>>) attributes {dimension_semantics = [#tpu.dimension_semantics<parallel>, #tpu.dimension_semantics<arbitrary>], iteration_bounds = array<i64: 2, 1>, scalar_prefetch = 0 : i64, scratch_operands = 2 : i64, tpu.core_type = #tpu.core_type<tc>, window_params = [{transform_indices = @transform_0, window_bounds = array<i64: 1, 16, 256>}, {transform_indices = @transform_1, window_bounds = array<i64: 1, 1, 1>}, {transform_indices = @transform_2, window_bounds = array<i64: 1, 1, 1>}]} {
    %c0_i32 = arith.constant 0 : i32
    %0 = arith.cmpi eq, %arg1, %c0_i32 : i32
    %1 = arith.extui %0 : i1 to i32
    %c0_i32_0 = arith.constant 0 : i32
    %2 = arith.cmpi ne, %1, %c0_i32_0 : i32
    scf.if %2 {
      %cst_14 = arith.constant 0.000000e+00 : f32
      %25 = vector.broadcast %cst_14 : f32 to vector<1x1xf32>
      %c0_15 = arith.constant 0 : index
      %c0_16 = arith.constant 0 : index
      %26 = vector.load %arg5[%c0_15, %c0_16] : memref<1x1xf32, #tpu.memory_space<vmem>>, vector<1x1xf32>
      tpu.vector_store %arg5[%c0_15, %c0_16], %25 {strides = array<i32>} : memref<1x1xf32, #tpu.memory_space<vmem>>, vector<1x1xf32>,
      %cst_17 = arith.constant 0.000000e+00 : f32
      %27 = vector.broadcast %cst_17 : f32 to vector<1x1xf32>
      %c0_18 = arith.constant 0 : index
      %c0_19 = arith.constant 0 : index
      %28 = vector.load %arg6[%c0_18, %c0_19] : memref<1x1xf32, #tpu.memory_space<vmem>>, vector<1x1xf32>
      tpu.vector_store %arg6[%c0_18, %c0_19], %27 {strides = array<i32>} : memref<1x1xf32, #tpu.memory_space<vmem>>, vector<1x1xf32>,
    } else {
    }
    %c0 = arith.constant 0 : index
    %c0_1 = arith.constant 0 : index
    %c0_2 = arith.constant 0 : index
    %3 = vector.load %arg2[%c0, %c0_1, %c0_2] : memref<1x16x256xf32, #tpu.memory_space<vmem>>, vector<1x16x256xf32>
    %4 = vector.shape_cast %3 : vector<1x16x256xf32> to vector<16x256xf32>
    %c0_3 = arith.constant 0 : index
    %c0_4 = arith.constant 0 : index
    %5 = vector.load %arg5[%c0_3, %c0_4] : memref<1x1xf32, #tpu.memory_space<vmem>>, vector<1x1xf32>
    %6 = vector.shape_cast %4 : vector<16x256xf32> to vector<1x16x256xf32>
    %cst = arith.constant dense<0.000000e+00> : vector<1xf32>
    %7 = vector.multi_reduction <add>, %6, %cst [1, 2] : vector<1x16x256xf32> to vector<1xf32>
    %8 = vector.shape_cast %7 : vector<1xf32> to vector<1x1x1xf32>
    %9 = vector.extract %8[0, 0, 0] : f32 from vector<1x1x1xf32>
    %10 = vector.broadcast %9 : f32 to vector<1x1xf32>
    %11 = arith.addf %5, %10 : vector<1x1xf32>
    %c0_5 = arith.constant 0 : index
    %c0_6 = arith.constant 0 : index
    %12 = vector.load %arg5[%c0_5, %c0_6] : memref<1x1xf32, #tpu.memory_space<vmem>>, vector<1x1xf32>
    tpu.vector_store %arg5[%c0_5, %c0_6], %11 {strides = array<i32>} : memref<1x1xf32, #tpu.memory_space<vmem>>, vector<1x1xf32>,
    %c0_7 = arith.constant 0 : index
    %c0_8 = arith.constant 0 : index
    %13 = vector.load %arg6[%c0_7, %c0_8] : memref<1x1xf32, #tpu.memory_space<vmem>>, vector<1x1xf32>
    %14 = arith.mulf %4, %4 : vector<16x256xf32>
    %15 = vector.shape_cast %14 : vector<16x256xf32> to vector<1x16x256xf32>
    %cst_9 = arith.constant dense<0.000000e+00> : vector<1xf32>
    %16 = vector.multi_reduction <add>, %15, %cst_9 [1, 2] : vector<1x16x256xf32> to vector<1xf32>
    %17 = vector.shape_cast %16 : vector<1xf32> to vector<1x1x1xf32>
    %18 = vector.extract %17[0, 0, 0] : f32 from vector<1x1x1xf32>
    %19 = vector.broadcast %18 : f32 to vector<1x1xf32>
    %20 = arith.addf %13, %19 : vector<1x1xf32>
    %c0_10 = arith.constant 0 : index
    %c0_11 = arith.constant 0 : index
    %21 = vector.load %arg6[%c0_10, %c0_11] : memref<1x1xf32, #tpu.memory_space<vmem>>, vector<1x1xf32>
    tpu.vector_store %arg6[%c0_10, %c0_11], %20 {strides = array<i32>} : memref<1x1xf32, #tpu.memory_space<vmem>>, vector<1x1xf32>,
    %c0_i32_12 = arith.constant 0 : i32
    %22 = arith.cmpi eq, %arg1, %c0_i32_12 : i32
    %23 = arith.extui %22 : i1 to i32
    %c0_i32_13 = arith.constant 0 : i32
    %24 = arith.cmpi ne, %23, %c0_i32_13 : i32
    scf.if %24 {
      %c0_14 = arith.constant 0 : index
      %c0_15 = arith.constant 0 : index
      %25 = vector.load %arg5[%c0_14, %c0_15] : memref<1x1xf32, #tpu.memory_space<vmem>>, vector<1x1xf32>
      %cst_16 = arith.constant 2.44140625E-4 : f32
      %26 = vector.broadcast %cst_16 : f32 to vector<1x1xf32>
      %27 = arith.mulf %25, %26 : vector<1x1xf32>
      %c0_17 = arith.constant 0 : index
      %c0_18 = arith.constant 0 : index
      %28 = vector.load %arg6[%c0_17, %c0_18] : memref<1x1xf32, #tpu.memory_space<vmem>>, vector<1x1xf32>
      %cst_19 = arith.constant 2.44140625E-4 : f32
      %29 = vector.broadcast %cst_19 : f32 to vector<1x1xf32>
      %30 = arith.mulf %28, %29 : vector<1x1xf32>
      %31 = arith.mulf %27, %27 : vector<1x1xf32>
      %32 = arith.subf %30, %31 : vector<1x1xf32>
      %cst_20 = arith.constant 0.000000e+00 : f32
      %33 = vector.broadcast %cst_20 : f32 to vector<1x1xf32>
      %34 = arith.maximumf %32, %33 : vector<1x1xf32>
      %c0_21 = arith.constant 0 : index
      %c0_22 = arith.constant 0 : index
      %c0_23 = arith.constant 0 : index
      %35 = vector.load %arg3[%c0_21, %c0_22, %c0_23] : memref<1x1x1xf32, #tpu.memory_space<vmem>>, vector<1x1x1xf32>
      %36 = vector.shape_cast %35 : vector<1x1x1xf32> to vector<1x1xf32>
      %37 = vector.shape_cast %27 : vector<1x1xf32> to vector<1x1x1xf32>
      tpu.vector_store %arg3[%c0_21, %c0_22, %c0_23], %37 {strides = array<i32>} : memref<1x1x1xf32, #tpu.memory_space<vmem>>, vector<1x1x1xf32>,
      %cst_24 = arith.constant 9.99999974E-6 : f32
      %38 = vector.broadcast %cst_24 : f32 to vector<1x1xf32>
      %39 = arith.addf %34, %38 : vector<1x1xf32>
      %40 = math.rsqrt %39 : vector<1x1xf32>
      %c0_25 = arith.constant 0 : index
      %c0_26 = arith.constant 0 : index
      %c0_27 = arith.constant 0 : index
      %41 = vector.load %arg4[%c0_25, %c0_26, %c0_27] : memref<1x1x1xf32, #tpu.memory_space<vmem>>, vector<1x1x1xf32>
      %42 = vector.shape_cast %41 : vector<1x1x1xf32> to vector<1x1xf32>
      %43 = vector.shape_cast %40 : vector<1x1xf32> to vector<1x1x1xf32>
      tpu.vector_store %arg4[%c0_25, %c0_26, %c0_27], %43 {strides = array<i32>} : memref<1x1x1xf32, #tpu.memory_space<vmem>>, vector<1x1x1xf32>,
    } else {
    }
    return
  }
  func.func @transform_0(%arg0: i32, %arg1: i32) -> (i32, i32, i32) {
    %c0_i32 = arith.constant 0 : i32
    %c0_i32_0 = arith.constant 0 : i32
    return %arg0, %c0_i32, %arg1 : i32, i32, i32
  }
  func.func @transform_1(%arg0: i32, %arg1: i32) -> (i32, i32, i32) {
    %c0_i32 = arith.constant 0 : i32
    %c0_i32_0 = arith.constant 0 : i32
    %c0_i32_1 = arith.constant 0 : i32
    return %arg0, %c0_i32, %c0_i32_0 : i32, i32, i32
  }
  func.func @transform_2(%arg0: i32, %arg1: i32) -> (i32, i32, i32) {
    %c0_i32 = arith.constant 0 : i32
    %c0_i32_0 = arith.constant 0 : i32
    %c0_i32_1 = arith.constant 0 : i32
    return %arg0, %c0_i32, %c0_i32_0 : i32, i32, i32
  }
}

</mosaic_0001>

<llo_original>
// kernel: tpu_custom_call.1
$region0: #{tpu_custom_call.1}
  #allocation0 [shape = 'u32[]', space=smem, size = 0x4, offset = 0x4, fixed_abs, tag = 'smem constant byte address 0x4 - core index']
  #allocation1 [shape = 'u32[72,128]{1,0:T(1,128)}', space=vmem, size = 0x9000, scoped, tag = 'internal scratch']
  #allocation2 [shape = 'f32[1,1]{1,0:T(1,128)}', space=vmem, size = 0x200, scoped, tag = 'scratch operand']
  #allocation3 [shape = 'f32[1,1]{1,0:T(1,128)}', space=vmem, size = 0x200, scoped, tag = 'scratch operand']
  %s0 = inlined_call_operand.hbm [shape: f32[2,16,256], index: 0, kind: input, shape index: {}]
  %s1 = inlined_call_operand.vmem [shape: f32[2,1,1], index: 1, kind: output, shape index: {0}]
  %s2 = inlined_call_operand.vmem [shape: f32[2,1,1], index: 2, kind: output, shape index: {1}]
  %3 = xla_tuple %s1, %s2
  %s4 = sld [smem:[#allocation0]]
  $region57: #{tpu_custom_call.1} parent=0
    _
  %s6 = ssub.s32 1, %s4
  %s7 = scalar_select 0, %s6, %s4
  $region1: #{tpu_custom_call.1} parent=0
    #allocation4 [shape = 'u8[32768]{0}', space=vmem, size = 0x8000, scoped, tag = 'input window, operand 0']
    #allocation5 [shape = 's32[2]{0}', space=sflag, size = 0x8, scoped, tag = 'scoped memory for tpu_custom_call.1']
    %8 = vsyncpa [#allocation5], 0
    %s9 = scalar_lea.sflag [#allocation5], 1
    %10 = vsyncpa %s9, 0
    loop: start=0, step=1, limit=4
    $region2: #{tpu_custom_call.1} parent=1 // loop_pre_header
      _
    $region3: #{tpu_custom_call.1} parent=1 // loop_header
      %s12 = sphi 0, %s16
      %p13 = scmp.ge.s32.totalorder %s12, 4
      %s19 = sphi 0, %s31
      %s20 = sphi 0, %s27
      %s21 = sphi 0, %s19
      %s22 = sphi 0, %s20
      %s23 = sphi 0, %s21
      %s24 = sphi 0, %s22
      %s36 = sphi 0, %s38
      %s39 = sphi 0, %s36
      %s40 = sphi 0, %s39
      %s56 = sphi 0, %s40
      %s62 = sphi 0, %s64
      %s65 = sphi 0, %s62
      %s66 = sphi 0, %s65
      %s82 = sphi 0, %s66
      %s88 = sphi 0, %s90
      %s91 = sphi 0, %s88
      %s92 = sphi 0, %s91
      %s108 = sphi 0, %s92
    $region4: #{tpu_custom_call.1} parent=1 // loop_header_branch
      %15 = sbr.rel (%p13) target = $region8
    $region5: #{tpu_custom_call.1} parent=1 // loop_body
      %s17 = ssub.s32 %s12, 1
      %s18 = ssub.s32 %s12, 2
      %s25 = sadd.s32 1, %s20
      %p26 = scmp.ge.s32.totalorder %s25, 1
      %s27 = scalar_select %p26, 0, %s25
      %s28 = sadd.s32 1, %s19
      %s29 = scalar_select %p26, %s28, %s19
      %p30 = scmp.ge.s32.totalorder %s29, 2
      %s31 = scalar_select %p30, 0, %s29
      %s32 = ssub.s32 %s19, %s31
      %s33 = ssub.s32 %s20, %s27
      %s34 = sor.u32 %s32, %s33
      %p35 = scmp.eq.s32.totalorder %s34, 0
      %s37 = sadd.s32 %s36, 1
      %s38 = scalar_select %p35, %s36, %s37
      %p41 = pneg %p35
      %p42 = scmp.eq.s32.totalorder %s12, 1
      %p43 = por %p41, %p42
      %p44 = scmp.ne.s32.totalorder %s36, %s39
      %p45 = scmp.eq.s32.totalorder %s12, 0
      %p46 = por %p44, %p45
      %p47 = scmp.ne.s32.totalorder %s36, %s39
      %p48 = scmp.eq.s32.totalorder %s17, 1
      %p49 = por %p47, %p48
      %p50 = scmp.ne.s32.totalorder %s39, %s40
      %p51 = scmp.eq.s32.totalorder %s17, 0
      %p52 = por %p50, %p51
      %p53 = scmp.ne.s32.totalorder %s39, %s40
      %p54 = scmp.eq.s32.totalorder %s18, 1
      %p55 = por %p53, %p54
      %p57 = scmp.ne.s32.totalorder %s40, %s56
      %p58 = scmp.eq.s32.totalorder %s18, 0
      %p59 = por %p57, %p58
      %s60 = ssub.s32 %s19, %s31
      %p61 = scmp.eq.s32.totalorder %s60, 0
      %s63 = sadd.s32 %s62, 1
      %s64 = scalar_select %p61, %s62, %s63
      %p67 = pneg %p61
      %p68 = scmp.eq.s32.totalorder %s12, 1
      %p69 = por %p67, %p68
      %p70 = scmp.ne.s32.totalorder %s62, %s65
      %p71 = scmp.eq.s32.totalorder %s12, 0
      %p72 = por %p70, %p71
      %p73 = scmp.ne.s32.totalorder %s62, %s65
      %p74 = scmp.eq.s32.totalorder %s17, 1
      %p75 = por %p73, %p74
      %p76 = scmp.ne.s32.totalorder %s65, %s66
      %p77 = scmp.eq.s32.totalorder %s17, 0
      %p78 = por %p76, %p77
      %p79 = scmp.ne.s32.totalorder %s65, %s66
      %p80 = scmp.eq.s32.totalorder %s18, 1
      %p81 = por %p79, %p80
      %p83 = scmp.ne.s32.totalorder %s66, %s82
      %p84 = scmp.eq.s32.totalorder %s18, 0
      %p85 = por %p83, %p84
      %s86 = ssub.s32 %s19, %s31
      %p87 = scmp.eq.s32.totalorder %s86, 0
      %s89 = sadd.s32 %s88, 1
      %s90 = scalar_select %p87, %s88, %s89
      %p93 = pneg %p87
      %p94 = scmp.eq.s32.totalorder %s12, 1
      %p95 = por %p93, %p94
      %p96 = scmp.ne.s32.totalorder %s88, %s91
      %p97 = scmp.eq.s32.totalorder %s12, 0
      %p98 = por %p96, %p97
      %p99 = scmp.ne.s32.totalorder %s88, %s91
      %p100 = scmp.eq.s32.totalorder %s17, 1
      %p101 = por %p99, %p100
      %p102 = scmp.ne.s32.totalorder %s91, %s92
      %p103 = scmp.eq.s32.totalorder %s17, 0
      %p104 = por %p102, %p103
      %p105 = scmp.ne.s32.totalorder %s91, %s92
      %p106 = scmp.eq.s32.totalorder %s18, 1
      %p107 = por %p105, %p106
      %p109 = scmp.ne.s32.totalorder %s92, %s108
      %p110 = scmp.eq.s32.totalorder %s18, 0
      %p111 = por %p109, %p110
      %p112 = scmp.le.s32.totalorder 1, %s12
      %p113 = scmp.lt.s32.totalorder %s12, 3
      %p114 = pnand %p112, %p113
      %p115 = pneg %p114
      // Predicated region
      $region9: #{tpu_custom_call.1} parent=5 // pred_check
        _
      $region10: #{tpu_custom_call.1} parent=5 // pred_check_branch
        %117 = sbr.rel (%p114) target = $region12
      $region11: #{tpu_custom_call.1} parent=5 // pred_region
        %s118 = ssub.s32 %s12, 1
      $region12: #{tpu_custom_call.1} parent=5 // pred_fallthru
        _
      %p119 = scmp.lt.s32.totalorder %s12, 2
      // Predicated region
      $region13: #{tpu_custom_call.1} parent=5 // pred_check
        %p120 = pneg %p119
      $region14: #{tpu_custom_call.1} parent=5 // pred_check_branch
        %122 = sbr.rel (%p120) target = $region16
      $region15: #{tpu_custom_call.1} parent=5 // pred_region
        // Predicated region
        $region17: #{tpu_custom_call.1} parent=15 // pred_check
          %p123 = pneg %p46
        $region18: #{tpu_custom_call.1} parent=15 // pred_check_branch
          %125 = sbr.rel (%p123) target = $region20
        $region19: #{tpu_custom_call.1} parent=15 // pred_region
          %s126 = sand.u32 %s36, 1
          %s127 = scalar_lea.sflag [#allocation5], %s126
          %s128 = sand.u32 %s36, 1
          %s129 = smul.addr %s128, 32
          %s130 = scalar_lea.vmem [#allocation4], %s129
          %s131 = smul.u32 2, %s20
          %133 = vsyncadd %s127, 0
          %s134 = smul.addr %s19, 4
          %s135 = sadd.s32 %s131, %s134
          %s136 = smul.addr %s135, 8
          %s137 = scalar_lea.hbm %s0, %s136
          %s138 = sshll.u32 %s137, 4
          %s139 = int_to_ptr.hbm [resolvable:$true] %s138
          %s140 = sshll.u32 %s130, 4
          %s141 = int_to_ptr.vmem [resolvable:$true] %s140
          %146 = dma.hbm_to_vmem [thread:$0]  %s139, 512, %s141, %s127, 256, 256, 16
        $region20: #{tpu_custom_call.1} parent=15 // pred_fallthru
          _
      $region16: #{tpu_custom_call.1} parent=5 // pred_fallthru
        _
      %p147 = scmp.le.s32.totalorder 1, %s12
      %p148 = scmp.lt.s32.totalorder %s12, 3
      %p149 = pnand %p147, %p148
      %p150 = pneg %p149
      // Predicated region
      $region21: #{tpu_custom_call.1} parent=5 // pred_check
        _
      $region22: #{tpu_custom_call.1} parent=5 // pred_check_branch
        %152 = sbr.rel (%p149) target = $region24
      $region23: #{tpu_custom_call.1} parent=5 // pred_region
        %s153 = ssub.s32 %s12, 1
        %s154 = sand.u32 %s39, 1
        %s155 = scalar_lea.sflag [#allocation5], %s154
        %s156 = sand.u32 %s39, 1
        %s157 = smul.addr %s156, 32
        %s158 = scalar_lea.vmem [#allocation4], %s157
        // Predicated region
        $region25: #{tpu_custom_call.1} parent=23 // pred_check
          %p159 = pneg %p52
        $region26: #{tpu_custom_call.1} parent=23 // pred_check_branch
          %161 = sbr.rel (%p159) target = $region28
        $region27: #{tpu_custom_call.1} parent=23 // pred_region
          %163 = dma.done %s155, 512
        $region28: #{tpu_custom_call.1} parent=23 // pred_fallthru
          _
        %s164 = sand.u32 %s39, 1
        %s165 = scalar_lea.sflag [#allocation5], %s164
        %s166 = sand.u32 %s39, 1
        %s167 = smul.addr %s166, 32
        %s168 = scalar_lea.vmem [#allocation4], %s167
        %p169 = pneg %p52
        %p170 = pneg %p49
        %p171 = pneg %p78
        %p172 = pneg %p75
        %p173 = scmp.lt.s32.totalorder %s21, 1
        %s174 = scalar_select %p173, %s21, 1
        %s175 = scalar_lea.vmem %s1, %s174
        %p176 = pneg %p104
        %p177 = pneg %p101
        %p178 = scmp.lt.s32.totalorder %s21, 1
        %s179 = scalar_select %p178, %s21, 1
        %s180 = scalar_lea.vmem %s2, %s179
        %s181 = smul.u32 2, %s22
        %p182 = scmp.lt.s32.totalorder %s21, 1
        %s183 = scalar_select %p182, %s21, 1
        %s184 = scalar_lea.vmem %s1, %s183
        %p185 = scmp.lt.s32.totalorder %s21, 1
        %s186 = scalar_select %p185, %s21, 1
        %s187 = scalar_lea.vmem %s2, %s186
        %p188 = scmp.eq.s32.totalorder %s22, 0
        // Predicated region
        $region29: #{tpu_custom_call.1} parent=23 // pred_check
          %p189 = pneg %p188
        $region30: #{tpu_custom_call.1} parent=23 // pred_check_branch
          %191 = sbr.rel (%p189) target = $region32
        $region31: #{tpu_custom_call.1} parent=23 // pred_region
          %vm192 = vcmask 0
          %193 = vst.msk [vmem:[#allocation2] sm:$0x1] %vm192, 0.0
          %194 = vst.msk [vmem:[#allocation3] sm:$0x1] %vm192, 0.0
        $region32: #{tpu_custom_call.1} parent=23 // pred_fallthru
          _
        %v195 = vld [vmem:[%s158] sm:$0xff]
        %v196 = vld [vmem:[%s158 + $0x8] sm:$0xff]
        %v197 = vld [vmem:[%s158 + $0x10] sm:$0xff]
        %v198 = vld [vmem:[%s158 + $0x18] sm:$0xff]
        %v199 = vld [vmem:[#allocation2] sm:$0x1]
        %v200 = vadd.f32 %v195, %v196
        %v201 = vadd.f32 %v200, %v197
        %v202 = vadd.f32 %v201, %v198
        %203 = vadd.xlane.f32.xlu0 %v202
        %v204 = vpop.xlane.xlu0 %203
        %v205 = vrot.slane %v204, 4
        %v206 = vadd.f32 %v204, %v205
        %v207 = vrot.slane %v206, 2
        %v208 = vadd.f32 %v206, %v207
        %v209 = vrot.slane %v208, 1
        %v210 = vadd.f32 %v208, %v209
        %s211 = vtos %v210
        %v212 = vstv %s211
        %v213 = vadd.f32 %v199, %v212
        %vm214 = vcmask 0
        %215 = vst.msk [vmem:[#allocation2] sm:$0x1] %vm214, %v213
        %v216 = vld [vmem:[#allocation3] sm:$0x1]
        %v217 = vmul.f32 %v195, %v195
        %v218 = vmul.f32 %v196, %v196
        %v219 = vmul.f32 %v197, %v197
        %v220 = vmul.f32 %v198, %v198
        %v221 = vadd.f32 %v217, %v218
        %v222 = vadd.f32 %v221, %v219
        %v223 = vadd.f32 %v222, %v220
        %224 = vadd.xlane.f32.xlu0 %v223
        %v225 = vpop.xlane.xlu0 %224
        %v226 = vrot.slane %v225, 4
        %v227 = vadd.f32 %v225, %v226
        %v228 = vrot.slane %v227, 2
        %v229 = vadd.f32 %v227, %v228
        %v230 = vrot.slane %v229, 1
        %v231 = vadd.f32 %v229, %v230
        %s232 = vtos %v231
        %v233 = vstv %s232
        %v234 = vadd.f32 %v216, %v233
        %235 = vst.msk [vmem:[#allocation3] sm:$0x1] %vm214, %v234
        // Predicated region
        $region33: #{tpu_custom_call.1} parent=23 // pred_check
          %p236 = pneg %p188
        $region34: #{tpu_custom_call.1} parent=23 // pred_check_branch
          %238 = sbr.rel (%p236) target = $region36
        $region35: #{tpu_custom_call.1} parent=23 // pred_region
          %v239 = vld [vmem:[#allocation2] sm:$0x1]
          %v240 = vmul.f32 %v239, 0.00024414063
          %v241 = vld [vmem:[#allocation3] sm:$0x1]
          %v242 = vmul.f32 %v241, 0.00024414063
          %v243 = vmul.f32 %v240, %v240
          %v244 = vsub.f32 %v242, %v243
          %v245 = vmax.f32 %v244, 0.0
          %246 = vst.msk [vmem:[%s184] sm:$0x1] %vm214, %v240
          %v247 = vadd.f32 %v245, 1e-05
          %v248 = vrsqrt.pop %v247
          %v249 = vmul.f32 %v248, %v247
          %v250 = vmul.f32 %v249, %v248
          %v251 = vmul.f32 0.5, %v250
          %v252 = vsub.f32 1.5, %v251
          %v253 = vmul.f32 %v248, %v252
          %vm254 = vweird.f32 %v247
          %vm255 = vweird.f32 %v248
          %vm256 = vmor %vm254, %vm255
          %v257 = vsel %vm256, %v248, %v253
          %258 = vst.msk [vmem:[%s187] sm:$0x1] %vm214, %v257
        $region36: #{tpu_custom_call.1} parent=23 // pred_fallthru
          _
        %p259 = scmp.lt.s32.totalorder %s21, 1
        %s260 = scalar_select %p259, %s21, 1
        %s261 = scalar_lea.vmem %s1, %s260
        %p262 = scmp.lt.s32.totalorder %s21, 1
        %s263 = scalar_select %p262, %s21, 1
        %s264 = scalar_lea.vmem %s2, %s263
        // Predicated region
        $region37: #{tpu_custom_call.1} parent=23 // pred_check
          %p265 = pneg %p75
        $region38: #{tpu_custom_call.1} parent=23 // pred_check_branch
          %267 = sbr.rel (%p265) target = $region40
        $region39: #{tpu_custom_call.1} parent=23 // pred_region
          _
        $region40: #{tpu_custom_call.1} parent=23 // pred_fallthru
          _
        // Predicated region
        $region41: #{tpu_custom_call.1} parent=23 // pred_check
          %p268 = pneg %p101
        $region42: #{tpu_custom_call.1} parent=23 // pred_check_branch
          %270 = sbr.rel (%p268) target = $region44
        $region43: #{tpu_custom_call.1} parent=23 // pred_region
          _
        $region44: #{tpu_custom_call.1} parent=23 // pred_fallthru
          _
      $region24: #{tpu_custom_call.1} parent=5 // pred_fallthru
        _
      %p271 = scmp.le.s32.totalorder 2, %s12
      // Predicated region
      $region45: #{tpu_custom_call.1} parent=5 // pred_check
        %p272 = pneg %p271
      $region46: #{tpu_custom_call.1} parent=5 // pred_check_branch
        %274 = sbr.rel (%p272) target = $region48
      $region47: #{tpu_custom_call.1} parent=5 // pred_region
        %s275 = ssub.s32 %s12, 2
        // Predicated region
        $region49: #{tpu_custom_call.1} parent=47 // pred_check
          %p276 = pneg %p81
        $region50: #{tpu_custom_call.1} parent=47 // pred_check_branch
          %278 = sbr.rel (%p276) target = $region52
        $region51: #{tpu_custom_call.1} parent=47 // pred_region
          %p279 = scmp.lt.s32.totalorder %s23, 1
          %s280 = scalar_select %p279, %s23, 1
          %s281 = scalar_lea.vmem %s1, %s280
        $region52: #{tpu_custom_call.1} parent=47 // pred_fallthru
          _
        // Predicated region
        $region53: #{tpu_custom_call.1} parent=47 // pred_check
          %p282 = pneg %p107
        $region54: #{tpu_custom_call.1} parent=47 // pred_check_branch
          %284 = sbr.rel (%p282) target = $region56
        $region55: #{tpu_custom_call.1} parent=47 // pred_region
          %p285 = scmp.lt.s32.totalorder %s23, 1
          %s286 = scalar_select %p285, %s23, 1
          %s287 = scalar_lea.vmem %s2, %s286
        $region56: #{tpu_custom_call.1} parent=47 // pred_fallthru
          _
      $region48: #{tpu_custom_call.1} parent=5 // pred_fallthru
        _
    $region6: #{tpu_custom_call.1} parent=1 // loop_footer
      %s16 = sadd.s32 1, %s12
    $region7: #{tpu_custom_call.1} parent=1 // loop_footer_branch
      %11 = sbr.rel target = $region3
    $region8: #{tpu_custom_call.1} parent=1 // loop_exit
      _
    %288 = vsyncpa [#allocation5], 1
    %s289 = scalar_lea.sflag [#allocation5], 1
    %290 = vsyncpa %s289, 1

</llo_original>
